<compile_context>
chip_gen: v5e
topology: v5e:2x2
jax: 0.10.0
libtpu: 0.0.40
codegen_flags: <defaults>
</compile_context>

<pallas_src>
import jax
import jax.numpy as jnp
from jax.experimental import pallas as pl
from jax.experimental.pallas import tpu as pltpu


def _mlp_kernel(x_ref,
                w1_ref, b1_ref,
                w2_ref, b2_ref,
                w3_ref, b3_ref,
                w4_ref, b4_ref,
                out_ref):
    """Whole forward for one batch tile. All weights resident in VMEM (bf16)."""
    # fc1 + relu  (bf16 operands -> MXU, f32 accumulate)
    x = x_ref[...].astype(jnp.bfloat16)
    h = jnp.dot(x, w1_ref[...], preferred_element_type=jnp.float32) + b1_ref[...]
    h = jnp.maximum(h, 0.0)

    # fc2 + relu
    h = jnp.dot(h.astype(jnp.bfloat16), w2_ref[...],
                preferred_element_type=jnp.float32) + b2_ref[...]
    h = jnp.maximum(h, 0.0)

    # fc3 + relu
    h = jnp.dot(h.astype(jnp.bfloat16), w3_ref[...],
                preferred_element_type=jnp.float32) + b3_ref[...]
    h = jnp.maximum(h, 0.0)

    # fc4 + softmax over classes (dim=1), all in f32
    logits = jnp.dot(h.astype(jnp.bfloat16), w4_ref[...],
                     preferred_element_type=jnp.float32) + b4_ref[...]
    z = logits - jnp.max(logits, axis=-1, keepdims=True)
    e = jnp.exp(z)
    out_ref[...] = e * pl.reciprocal(jnp.sum(e, axis=-1, keepdims=True), approx=True)


def _round_up(v, mult):
    return ((v + mult - 1) // mult) * mult


def bbcar_mlp_forward(x, params, *, batch_tile=None,
                      vmem_limit_bytes=48 * 1024 * 1024):
    """params = dict with w1..w4 as (in, out) f32 and b1..b4 as (1, out) f32."""
    n, m = x.shape
    n_classes = params["w4"].shape[1]

    # Pick a pipelined, VMEM-sized batch tile: multiple of 8 (sublane), capped at
    # 1024 rows and at ~4 MiB of f32 X per tile (double-buffered by the pipeline).
    if batch_tile is None:
        cap = max(8, (4 * 1024 * 1024) // max(1, 4 * m))
        batch_tile = min(1024, cap, _round_up(n, 8))
    batch_tile = max(8, (batch_tile // 8) * 8)

    # Zero-pad the batch so the grid divides evenly (padded rows sliced off below).
    n_pad = _round_up(n, batch_tile)
    if n_pad != n:
        x = jnp.pad(x, ((0, n_pad - n), (0, 0)))

    # bf16 weights feed the native MXU path on all generations; biases stay f32.
    bf16 = lambda a: a.astype(jnp.bfloat16)
    w1, w2, w3, w4 = bf16(params["w1"]), bf16(params["w2"]), bf16(params["w3"]), bf16(params["w4"])
    b1, b2, b3, b4 = params["b1"], params["b2"], params["b3"], params["b4"]

    # Full-extent blocks for all parameters (small, stay resident in VMEM);
    # the grid only tiles the batch dimension.
    full = lambda arr: pl.BlockSpec(arr.shape, lambda i: (0, 0))
    grid = (n_pad // batch_tile,)

    out = pl.pallas_call(
        _mlp_kernel,
        out_shape=jax.ShapeDtypeStruct((n_pad, n_classes), jnp.float32),
        grid_spec=pltpu.PrefetchScalarGridSpec(
            num_scalar_prefetch=0,
            grid=grid,
            in_specs=[
                pl.BlockSpec((batch_tile, m), lambda i: (i, 0)),
                full(w1), full(b1),
                full(w2), full(b2),
                full(w3), full(b3),
                full(w4), full(b4),
            ],
            out_specs=pl.BlockSpec((batch_tile, n_classes), lambda i: (i, 0)),
        ),
        compiler_params=pltpu.CompilerParams(
            dimension_semantics=("parallel",),          # megacore-shardable batch axis
            vmem_limit_bytes=vmem_limit_bytes),
    )(x, w1, b1, w2, b2, w3, b3, w4, b4)

    return out[:n]


def init_params(key, m, n_classes):
    """Deterministic synthetic init (module shapes: m->400->200->20->n_classes)."""
    h1, h2, h3 = 400, 200, 20
    dims = [(m, h1), (h1, h2), (h2, h3), (h3, n_classes)]
    params = {}
    for idx, (din, dout) in enumerate(dims, start=1):
        key, kw, kb = jax.random.split(key, 3)
        bound = 1.0 / jnp.sqrt(din)  # matches torch.nn.Linear default scale
        params[f"w{idx}"] = jax.random.uniform(
            kw, (din, dout), jnp.float32, -bound, bound)
        params[f"b{idx}"] = jax.random.uniform(
            kb, (1, dout), jnp.float32, -bound, bound)
    return params


def reference_forward(x, p):
    h = jax.nn.relu(x @ p["w1"] + p["b1"])
    h = jax.nn.relu(h @ p["w2"] + p["b2"])
    h = jax.nn.relu(h @ p["w3"] + p["b3"])
    return jax.nn.softmax(h @ p["w4"] + p["b4"], axis=1)


if __name__ == "__main__":
    key = jax.random.PRNGKey(0)
    key, kx, kp = jax.random.split(key, 3)

    batch = 20      # non-multiple-of-8 to exercise pad + slice path
    m = 32          # input feature dim
    n_classes = 3   # len(np.unique(y)) in the original module

    x = jax.random.normal(kx, (batch, m), jnp.float32)
    params = init_params(kp, m, n_classes)

    # batch_tile=8 -> grid of 3 steps (exercises the pipelined multi-tile path).
    out = bbcar_mlp_forward(x, params, batch_tile=8)
    out = jax.block_until_ready(out)

    ref = reference_forward(x, params)
    assert out.shape == (batch, n_classes)
    # bf16 matmuls + approx reciprocal -> loose-but-safe tolerances vs f32 reference.
    assert jnp.allclose(out, ref, atol=3e-2, rtol=3e-2), "mismatch vs reference"
    assert jnp.allclose(jnp.sum(out, axis=1), 1.0, atol=1e-2), "softmax rows must sum to 1"

    # Also run with the default (auto) batch tile to cover that code path.
    out2 = jax.block_until_ready(bbcar_mlp_forward(x, params))
    assert jnp.allclose(out2, ref, atol=3e-2, rtol=3e-2), "mismatch vs reference (auto tile)"

    print("KERNEL_OK")
</pallas_src>

<mosaic_0001>
module attributes {stable_mosaic.version = 11 : i64} {
  func.func @_mlp_kernel(%arg0: i32, %arg1: memref<8x32xf32, #tpu.memory_space<vmem>>, %arg2: memref<32x400xbf16, #tpu.memory_space<vmem>>, %arg3: memref<1x400xf32, #tpu.memory_space<vmem>>, %arg4: memref<400x200xbf16, #tpu.memory_space<vmem>>, %arg5: memref<1x200xf32, #tpu.memory_space<vmem>>, %arg6: memref<200x20xbf16, #tpu.memory_space<vmem>>, %arg7: memref<1x20xf32, #tpu.memory_space<vmem>>, %arg8: memref<20x3xbf16, #tpu.memory_space<vmem>>, %arg9: memref<1x3xf32, #tpu.memory_space<vmem>>, %arg10: memref<8x3xf32, #tpu.memory_space<vmem>>) attributes {dimension_semantics = [#tpu.dimension_semantics<parallel>], iteration_bounds = array<i64: 3>, scalar_prefetch = 0 : i64, scratch_operands = 0 : i64, tpu.core_type = #tpu.core_type<tc>, window_params = [{transform_indices = @transform_0, window_bounds = array<i64: 8, 32>}, {pipeline_mode = #tpu.pipeline_mode<synchronous>, transform_indices = @transform_1, window_bounds = array<i64: 32, 400>}, {pipeline_mode = #tpu.pipeline_mode<synchronous>, transform_indices = @transform_2, window_bounds = array<i64: 1, 400>}, {pipeline_mode = #tpu.pipeline_mode<synchronous>, transform_indices = @transform_3, window_bounds = array<i64: 400, 200>}, {pipeline_mode = #tpu.pipeline_mode<synchronous>, transform_indices = @transform_4, window_bounds = array<i64: 1, 200>}, {pipeline_mode = #tpu.pipeline_mode<synchronous>, transform_indices = @transform_5, window_bounds = array<i64: 200, 20>}, {pipeline_mode = #tpu.pipeline_mode<synchronous>, transform_indices = @transform_6, window_bounds = array<i64: 1, 20>}, {pipeline_mode = #tpu.pipeline_mode<synchronous>, transform_indices = @transform_7, window_bounds = array<i64: 20, 3>}, {pipeline_mode = #tpu.pipeline_mode<synchronous>, transform_indices = @transform_8, window_bounds = array<i64: 1, 3>}, {transform_indices = @transform_9, window_bounds = array<i64: 8, 3>}]} {
    %c0 = arith.constant 0 : index
    %c0_0 = arith.constant 0 : index
    %0 = vector.load %arg1[%c0, %c0_0] : memref<8x32xf32, #tpu.memory_space<vmem>>, vector<8x32xf32>
    %1 = arith.truncf %0 : vector<8x32xf32> to vector<8x32xbf16>
    %c0_1 = arith.constant 0 : index
    %c0_2 = arith.constant 0 : index
    %2 = vector.load %arg2[%c0_1, %c0_2] : memref<32x400xbf16, #tpu.memory_space<vmem>>, vector<32x400xbf16>
    %cst = arith.constant dense<0.000000e+00> : vector<8x400xf32>
    %3 = tpu.matmul %1, %2, %cst {dimension_numbers = #tpu.dot_dimension_numbers<[1], [0], [0], [1], [0, 0, 1, 1], [], []>} : vector<8x32xbf16>, vector<32x400xbf16>, vector<8x400xf32> -> vector<8x400xf32>
    %c0_3 = arith.constant 0 : index
    %c0_4 = arith.constant 0 : index
    %4 = vector.load %arg3[%c0_3, %c0_4] : memref<1x400xf32, #tpu.memory_space<vmem>>, vector<1x400xf32>
    %5 = vector.broadcast %4 : vector<1x400xf32> to vector<8x400xf32>
    %6 = arith.addf %3, %5 : vector<8x400xf32>
    %cst_5 = arith.constant 0.000000e+00 : f32
    %7 = vector.broadcast %cst_5 : f32 to vector<8x400xf32>
    %8 = arith.maximumf %6, %7 : vector<8x400xf32>
    %9 = arith.truncf %8 : vector<8x400xf32> to vector<8x400xbf16>
    %c0_6 = arith.constant 0 : index
    %c0_7 = arith.constant 0 : index
    %10 = vector.load %arg4[%c0_6, %c0_7] : memref<400x200xbf16, #tpu.memory_space<vmem>>, vector<400x200xbf16>
    %cst_8 = arith.constant dense<0.000000e+00> : vector<8x200xf32>
    %11 = tpu.matmul %9, %10, %cst_8 {dimension_numbers = #tpu.dot_dimension_numbers<[1], [0], [0], [1], [0, 0, 1, 1], [], []>} : vector<8x400xbf16>, vector<400x200xbf16>, vector<8x200xf32> -> vector<8x200xf32>
    %c0_9 = arith.constant 0 : index
    %c0_10 = arith.constant 0 : index
    %12 = vector.load %arg5[%c0_9, %c0_10] : memref<1x200xf32, #tpu.memory_space<vmem>>, vector<1x200xf32>
    %13 = vector.broadcast %12 : vector<1x200xf32> to vector<8x200xf32>
    %14 = arith.addf %11, %13 : vector<8x200xf32>
    %cst_11 = arith.constant 0.000000e+00 : f32
    %15 = vector.broadcast %cst_11 : f32 to vector<8x200xf32>
    %16 = arith.maximumf %14, %15 : vector<8x200xf32>
    %17 = arith.truncf %16 : vector<8x200xf32> to vector<8x200xbf16>
    %c0_12 = arith.constant 0 : index
    %c0_13 = arith.constant 0 : index
    %18 = vector.load %arg6[%c0_12, %c0_13] : memref<200x20xbf16, #tpu.memory_space<vmem>>, vector<200x20xbf16>
    %cst_14 = arith.constant dense<0.000000e+00> : vector<8x20xf32>
    %19 = tpu.matmul %17, %18, %cst_14 {dimension_numbers = #tpu.dot_dimension_numbers<[1], [0], [0], [1], [0, 0, 1, 1], [], []>} : vector<8x200xbf16>, vector<200x20xbf16>, vector<8x20xf32> -> vector<8x20xf32>
    %c0_15 = arith.constant 0 : index
    %c0_16 = arith.constant 0 : index
    %20 = vector.load %arg7[%c0_15, %c0_16] : memref<1x20xf32, #tpu.memory_space<vmem>>, vector<1x20xf32>
    %21 = vector.broadcast %20 : vector<1x20xf32> to vector<8x20xf32>
    %22 = arith.addf %19, %21 : vector<8x20xf32>
    %cst_17 = arith.constant 0.000000e+00 : f32
    %23 = vector.broadcast %cst_17 : f32 to vector<8x20xf32>
    %24 = arith.maximumf %22, %23 : vector<8x20xf32>
    %25 = arith.truncf %24 : vector<8x20xf32> to vector<8x20xbf16>
    %c0_18 = arith.constant 0 : index
    %c0_19 = arith.constant 0 : index
    %26 = vector.load %arg8[%c0_18, %c0_19] : memref<20x3xbf16, #tpu.memory_space<vmem>>, vector<20x3xbf16>
    %cst_20 = arith.constant dense<0.000000e+00> : vector<8x3xf32>
    %27 = tpu.matmul %25, %26, %cst_20 {dimension_numbers = #tpu.dot_dimension_numbers<[1], [0], [0], [1], [0, 0, 1, 1], [], []>} : vector<8x20xbf16>, vector<20x3xbf16>, vector<8x3xf32> -> vector<8x3xf32>
    %c0_21 = arith.constant 0 : index
    %c0_22 = arith.constant 0 : index
    %28 = vector.load %arg9[%c0_21, %c0_22] : memref<1x3xf32, #tpu.memory_space<vmem>>, vector<1x3xf32>
    %29 = vector.broadcast %28 : vector<1x3xf32> to vector<8x3xf32>
    %30 = arith.addf %27, %29 : vector<8x3xf32>
    %cst_23 = arith.constant dense<0xFF800000> : vector<8xf32>
    %31 = vector.multi_reduction <maximumf>, %30, %cst_23 [1] : vector<8x3xf32> to vector<8xf32>
    %32 = vector.shape_cast %31 : vector<8xf32> to vector<8x1xf32>
    %33 = vector.broadcast %32 : vector<8x1xf32> to vector<8x3xf32>
    %34 = arith.subf %30, %33 : vector<8x3xf32>
    %35 = math.exp %34 : vector<8x3xf32>
    %cst_24 = arith.constant dense<0.000000e+00> : vector<8xf32>
    %36 = vector.multi_reduction <add>, %35, %cst_24 [1] : vector<8x3xf32> to vector<8xf32>
    %37 = vector.shape_cast %36 : vector<8xf32> to vector<8x1xf32>
    %38 = tpu.reciprocal %37 {approx = true} : vector<8x1xf32> -> vector<8x1xf32>
    %39 = vector.broadcast %38 : vector<8x1xf32> to vector<8x3xf32>
    %40 = arith.mulf %35, %39 : vector<8x3xf32>
    %c0_25 = arith.constant 0 : index
    %c0_26 = arith.constant 0 : index
    %41 = vector.load %arg10[%c0_25, %c0_26] : memref<8x3xf32, #tpu.memory_space<vmem>>, vector<8x3xf32>
    tpu.vector_store %arg10[%c0_25, %c0_26], %40 {strides = array<i32>} : memref<8x3xf32, #tpu.memory_space<vmem>>, vector<8x3xf32>,
    return
  }
  func.func @transform_0(%arg0: i32) -> (i32, i32) {
    %c0_i32 = arith.constant 0 : i32
    %c0_i32_0 = arith.constant 0 : i32
    return %arg0, %c0_i32 : i32, i32
  }
  func.func @transform_1(%arg0: i32) -> (i32, i32) {
    %c0_i32 = arith.constant 0 : i32
    %c0_i32_0 = arith.constant 0 : i32
    %c0_i32_1 = arith.constant 0 : i32
    return %c0_i32, %c0_i32_0 : i32, i32
  }
  func.func @transform_2(%arg0: i32) -> (i32, i32) {
    %c0_i32 = arith.constant 0 : i32
    %c0_i32_0 = arith.constant 0 : i32
    %c0_i32_1 = arith.constant 0 : i32
    return %c0_i32, %c0_i32_0 : i32, i32
  }
  func.func @transform_3(%arg0: i32) -> (i32, i32) {
    %c0_i32 = arith.constant 0 : i32
    %c0_i32_0 = arith.constant 0 : i32
    %c0_i32_1 = arith.constant 0 : i32
    return %c0_i32, %c0_i32_0 : i32, i32
  }
  func.func @transform_4(%arg0: i32) -> (i32, i32) {
    %c0_i32 = arith.constant 0 : i32
    %c0_i32_0 = arith.constant 0 : i32
    %c0_i32_1 = arith.constant 0 : i32
    return %c0_i32, %c0_i32_0 : i32, i32
  }
  func.func @transform_5(%arg0: i32) -> (i32, i32) {
    %c0_i32 = arith.constant 0 : i32
    %c0_i32_0 = arith.constant 0 : i32
    %c0_i32_1 = arith.constant 0 : i32
    return %c0_i32, %c0_i32_0 : i32, i32
  }
  func.func @transform_6(%arg0: i32) -> (i32, i32) {
    %c0_i32 = arith.constant 0 : i32
    %c0_i32_0 = arith.constant 0 : i32
    %c0_i32_1 = arith.constant 0 : i32
    return %c0_i32, %c0_i32_0 : i32, i32
  }
  func.func @transform_7(%arg0: i32) -> (i32, i32) {
    %c0_i32 = arith.constant 0 : i32
    %c0_i32_0 = arith.constant 0 : i32
    %c0_i32_1 = arith.constant 0 : i32
    return %c0_i32, %c0_i32_0 : i32, i32
  }
  func.func @transform_8(%arg0: i32) -> (i32, i32) {
    %c0_i32 = arith.constant 0 : i32
    %c0_i32_0 = arith.constant 0 : i32
    %c0_i32_1 = arith.constant 0 : i32
    return %c0_i32, %c0_i32_0 : i32, i32
  }
  func.func @transform_9(%arg0: i32) -> (i32, i32) {
    %c0_i32 = arith.constant 0 : i32
    %c0_i32_0 = arith.constant 0 : i32
    return %arg0, %c0_i32 : i32, i32
  }
}

</mosaic_0001>

<llo_original>
// kernel: tpu_custom_call.1
$region0: #{tpu_custom_call.1}
  #allocation0 [shape = 'u32[]', space=smem, size = 0x4, offset = 0x4, fixed_abs, tag = 'smem constant byte address 0x4 - core index']
  #allocation1 [shape = 'u32[72,128]{1,0:T(1,128)}', space=vmem, size = 0x9000, scoped, tag = 'internal scratch']
  %s0 = inlined_call_operand.vmem [shape: f32[24,32], index: 0, kind: input, shape index: {}]
  %s1 = inlined_call_operand.vmem [shape: bf16[32,400], index: 1, kind: input, shape index: {}]
  %s2 = inlined_call_operand.vmem [shape: f32[1,400], index: 2, kind: input, shape index: {}]
  %s3 = inlined_call_operand.hbm [shape: bf16[400,200], index: 3, kind: input, shape index: {}]
  %s4 = inlined_call_operand.vmem [shape: f32[1,200], index: 4, kind: input, shape index: {}]
  %s5 = inlined_call_operand.vmem [shape: bf16[200,20], index: 5, kind: input, shape index: {}]
  %s6 = inlined_call_operand.vmem [shape: f32[1,20], index: 6, kind: input, shape index: {}]
  %s7 = inlined_call_operand.vmem [shape: bf16[20,3], index: 7, kind: input, shape index: {}]
  %s8 = inlined_call_operand.vmem [shape: f32[1,3], index: 8, kind: input, shape index: {}]
  %s9 = inlined_call_operand.vmem [shape: f32[24,3], index: 9, kind: output, shape index: {}]
  %s10 = sld [smem:[#allocation0]]
  $region73: #{tpu_custom_call.1} parent=0
    _
  %s12 = ssub.s32 1, %s10
  %s13 = scalar_select 0, %s12, %s10
  $region1: #{tpu_custom_call.1} parent=0
    #allocation2 [shape = 'u8[204800]{0}', space=vmem, size = 0x32000, scoped, tag = 'input window, operand 3, single buffered']
    #allocation3 [shape = 's32[2]{0}', space=sflag, size = 0x8, scoped, tag = 'scoped memory for tpu_custom_call.1']
    %14 = vsyncpa [#allocation3], 0
    loop: start=0, step=1, limit=5
    $region2: #{tpu_custom_call.1} parent=1 // loop_pre_header
      _
    $region3: #{tpu_custom_call.1} parent=1 // loop_header
      %s16 = sphi 0, %s20
      %p17 = scmp.ge.s32.totalorder %s16, 5
      %s26 = sphi 0, %s28
      %s29 = sphi 0, %s26
      %s30 = sphi 0, %s29
      %s46 = sphi 0, %s30
      %s50 = sphi 0, %s50
      %s52 = sphi 0, %s50
      %s53 = sphi 0, %s52
      %s67 = sphi 0, %s53
      %s71 = sphi 0, %s71
      %s73 = sphi 0, %s71
      %s74 = sphi 0, %s73
      %s88 = sphi 0, %s74
      %s92 = sphi 0, %s92
      %s94 = sphi 0, %s92
      %s95 = sphi 0, %s94
      %s109 = sphi 0, %s95
      %s113 = sphi 0, %s113
      %s115 = sphi 0, %s113
      %s116 = sphi 0, %s115
      %s130 = sphi 0, %s116
      %s134 = sphi 0, %s134
      %s136 = sphi 0, %s134
      %s137 = sphi 0, %s136
      %s151 = sphi 0, %s137
      %s155 = sphi 0, %s155
      %s157 = sphi 0, %s155
      %s158 = sphi 0, %s157
      %s172 = sphi 0, %s158
      %s176 = sphi 0, %s176
      %s178 = sphi 0, %s176
      %s179 = sphi 0, %s178
      %s193 = sphi 0, %s179
      %s197 = sphi 0, %s197
      %s199 = sphi 0, %s197
      %s200 = sphi 0, %s199
      %s214 = sphi 0, %s200
      %s220 = sphi 0, %s222
      %s223 = sphi 0, %s220
      %s224 = sphi 0, %s223
      %s240 = sphi 0, %s224
    $region4: #{tpu_custom_call.1} parent=1 // loop_header_branch
      %19 = sbr.rel (%p17) target = $region8
    $region5: #{tpu_custom_call.1} parent=1 // loop_body
      %s21 = ssub.s32 %s16, 1
      %s22 = ssub.s32 %s16, 2
      %s23 = sadd.s32 %s16, 1
      %s24 = ssub.s32 %s16, %s23
      %p25 = scmp.eq.s32.totalorder %s24, 0
      %s27 = sadd.s32 %s26, 1
      %s28 = scalar_select %p25, %s26, %s27
      %p31 = pneg %p25
      %p32 = scmp.eq.s32.totalorder %s16, 2
      %p33 = por %p31, %p32
      %p34 = scmp.ne.s32.totalorder %s26, %s29
      %p35 = scmp.eq.s32.totalorder %s16, 0
      %p36 = por %p34, %p35
      %p37 = scmp.ne.s32.totalorder %s26, %s29
      %p38 = scmp.eq.s32.totalorder %s21, 2
      %p39 = por %p37, %p38
      %p40 = scmp.ne.s32.totalorder %s29, %s30
      %p41 = scmp.eq.s32.totalorder %s21, 0
      %p42 = por %p40, %p41
      %p43 = scmp.ne.s32.totalorder %s29, %s30
      %p44 = scmp.eq.s32.totalorder %s22, 2
      %p45 = por %p43, %p44
      %p47 = scmp.ne.s32.totalorder %s30, %s46
      %p48 = scmp.eq.s32.totalorder %s22, 0
      %p49 = por %p47, %p48
      %s51 = sadd.s32 %s50, 1
      %p54 = scmp.eq.s32.totalorder %s16, 2
      %p55 = scmp.ne.s32.totalorder %s50, %s52
      %p56 = scmp.eq.s32.totalorder %s16, 0
      %p57 = por %p55, %p56
      %p58 = scmp.ne.s32.totalorder %s50, %s52
      %p59 = scmp.eq.s32.totalorder %s21, 2
      %p60 = por %p58, %p59
      %p61 = scmp.ne.s32.totalorder %s52, %s53
      %p62 = scmp.eq.s32.totalorder %s21, 0
      %p63 = por %p61, %p62
      %p64 = scmp.ne.s32.totalorder %s52, %s53
      %p65 = scmp.eq.s32.totalorder %s22, 2
      %p66 = por %p64, %p65
      %p68 = scmp.ne.s32.totalorder %s53, %s67
      %p69 = scmp.eq.s32.totalorder %s22, 0
      %p70 = por %p68, %p69
      %s72 = sadd.s32 %s71, 1
      %p75 = scmp.eq.s32.totalorder %s16, 2
      %p76 = scmp.ne.s32.totalorder %s71, %s73
      %p77 = scmp.eq.s32.totalorder %s16, 0
      %p78 = por %p76, %p77
      %p79 = scmp.ne.s32.totalorder %s71, %s73
      %p80 = scmp.eq.s32.totalorder %s21, 2
      %p81 = por %p79, %p80
      %p82 = scmp.ne.s32.totalorder %s73, %s74
      %p83 = scmp.eq.s32.totalorder %s21, 0
      %p84 = por %p82, %p83
      %p85 = scmp.ne.s32.totalorder %s73, %s74
      %p86 = scmp.eq.s32.totalorder %s22, 2
      %p87 = por %p85, %p86
      %p89 = scmp.ne.s32.totalorder %s74, %s88
      %p90 = scmp.eq.s32.totalorder %s22, 0
      %p91 = por %p89, %p90
      %s93 = sadd.s32 %s92, 1
      %p96 = scmp.eq.s32.totalorder %s16, 2
      %p97 = scmp.ne.s32.totalorder %s92, %s94
      %p98 = scmp.eq.s32.totalorder %s16, 0
      %p99 = por %p97, %p98
      %p100 = scmp.ne.s32.totalorder %s92, %s94
      %p101 = scmp.eq.s32.totalorder %s21, 2
      %p102 = por %p100, %p101
      %p103 = scmp.ne.s32.totalorder %s94, %s95
      %p104 = scmp.eq.s32.totalorder %s21, 0
      %p105 = por %p103, %p104
      %p106 = scmp.ne.s32.totalorder %s94, %s95
      %p107 = scmp.eq.s32.totalorder %s22, 2
      %p108 = por %p106, %p107
      %p110 = scmp.ne.s32.totalorder %s95, %s109
      %p111 = scmp.eq.s32.totalorder %s22, 0
      %p112 = por %p110, %p111
      %s114 = sadd.s32 %s113, 1
      %p117 = scmp.eq.s32.totalorder %s16, 2
      %p118 = scmp.ne.s32.totalorder %s113, %s115
      %p119 = scmp.eq.s32.totalorder %s16, 0
      %p120 = por %p118, %p119
      %p121 = scmp.ne.s32.totalorder %s113, %s115
      %p122 = scmp.eq.s32.totalorder %s21, 2
      %p123 = por %p121, %p122
      %p124 = scmp.ne.s32.totalorder %s115, %s116
      %p125 = scmp.eq.s32.totalorder %s21, 0
      %p126 = por %p124, %p125
      %p127 = scmp.ne.s32.totalorder %s115, %s116
      %p128 = scmp.eq.s32.totalorder %s22, 2
      %p129 = por %p127, %p128
      %p131 = scmp.ne.s32.totalorder %s116, %s130
      %p132 = scmp.eq.s32.totalorder %s22, 0
      %p133 = por %p131, %p132
      %s135 = sadd.s32 %s134, 1
      %p138 = scmp.eq.s32.totalorder %s16, 2
      %p139 = scmp.ne.s32.totalorder %s134, %s136
      %p140 = scmp.eq.s32.totalorder %s16, 0
      %p141 = por %p139, %p140
      %p142 = scmp.ne.s32.totalorder %s134, %s136
      %p143 = scmp.eq.s32.totalorder %s21, 2
      %p144 = por %p142, %p143
      %p145 = scmp.ne.s32.totalorder %s136, %s137
      %p146 = scmp.eq.s32.totalorder %s21, 0
      %p147 = por %p145, %p146
      %p148 = scmp.ne.s32.totalorder %s136, %s137
      %p149 = scmp.eq.s32.totalorder %s22, 2
      %p150 = por %p148, %p149
      %p152 = scmp.ne.s32.totalorder %s137, %s151
      %p153 = scmp.eq.s32.totalorder %s22, 0
      %p154 = por %p152, %p153
      %s156 = sadd.s32 %s155, 1
      %p159 = scmp.eq.s32.totalorder %s16, 2
      %p160 = scmp.ne.s32.totalorder %s155, %s157
      %p161 = scmp.eq.s32.totalorder %s16, 0
      %p162 = por %p160, %p161
      %p163 = scmp.ne.s32.totalorder %s155, %s157
      %p164 = scmp.eq.s32.totalorder %s21, 2
      %p165 = por %p163, %p164
      %p166 = scmp.ne.s32.totalorder %s157, %s158
      %p167 = scmp.eq.s32.totalorder %s21, 0
      %p168 = por %p166, %p167
      %p169 = scmp.ne.s32.totalorder %s157, %s158
      %p170 = scmp.eq.s32.totalorder %s22, 2
      %p171 = por %p169, %p170
      %p173 = scmp.ne.s32.totalorder %s158, %s172
      %p174 = scmp.eq.s32.totalorder %s22, 0
      %p175 = por %p173, %p174
      %s177 = sadd.s32 %s176, 1
      %p180 = scmp.eq.s32.totalorder %s16, 2
      %p181 = scmp.ne.s32.totalorder %s176, %s178
      %p182 = scmp.eq.s32.totalorder %s16, 0
      %p183 = por %p181, %p182
      %p184 = scmp.ne.s32.totalorder %s176, %s178
      %p185 = scmp.eq.s32.totalorder %s21, 2
      %p186 = por %p184, %p185
      %p187 = scmp.ne.s32.totalorder %s178, %s179
      %p188 = scmp.eq.s32.totalorder %s21, 0
      %p189 = por %p187, %p188
      %p190 = scmp.ne.s32.totalorder %s178, %s179
      %p191 = scmp.eq.s32.totalorder %s22, 2
      %p192 = por %p190, %p191
      %p194 = scmp.ne.s32.totalorder %s179, %s193
      %p195 = scmp.eq.s32.totalorder %s22, 0
      %p196 = por %p194, %p195
      %s198 = sadd.s32 %s197, 1
      %p201 = scmp.eq.s32.totalorder %s16, 2
      %p202 = scmp.ne.s32.totalorder %s197, %s199
      %p203 = scmp.eq.s32.totalorder %s16, 0
      %p204 = por %p202, %p203
      %p205 = scmp.ne.s32.totalorder %s197, %s199
      %p206 = scmp.eq.s32.totalorder %s21, 2
      %p207 = por %p205, %p206
      %p208 = scmp.ne.s32.totalorder %s199, %s200
      %p209 = scmp.eq.s32.totalorder %s21, 0
      %p210 = por %p208, %p209
      %p211 = scmp.ne.s32.totalorder %s199, %s200
      %p212 = scmp.eq.s32.totalorder %s22, 2
      %p213 = por %p211, %p212
      %p215 = scmp.ne.s32.totalorder %s200, %s214
      %p216 = scmp.eq.s32.totalorder %s22, 0
      %p217 = por %p215, %p216
      %s218 = ssub.s32 %s16, %s23
      %p219 = scmp.eq.s32.totalorder %s218, 0
      %s221 = sadd.s32 %s220, 1
      %s222 = scalar_select %p219, %s220, %s221
      %p225 = pneg %p219
      %p226 = scmp.eq.s32.totalorder %s16, 2
      %p227 = por %p225, %p226
      %p228 = scmp.ne.s32.totalorder %s220, %s223
      %p229 = scmp.eq.s32.totalorder %s16, 0
      %p230 = por %p228, %p229
      %p231 = scmp.ne.s32.totalorder %s220, %s223
      %p232 = scmp.eq.s32.totalorder %s21, 2
      %p233 = por %p231, %p232
      %p234 = scmp.ne.s32.totalorder %s223, %s224
      %p235 = scmp.eq.s32.totalorder %s21, 0
      %p236 = por %p234, %p235
      %p237 = scmp.ne.s32.totalorder %s223, %s224
      %p238 = scmp.eq.s32.totalorder %s22, 2
      %p239 = por %p237, %p238
      %p241 = scmp.ne.s32.totalorder %s224, %s240
      %p242 = scmp.eq.s32.totalorder %s22, 0
      %p243 = por %p241, %p242
      %p244 = scmp.le.s32.totalorder 1, %s16
      %p245 = scmp.lt.s32.totalorder %s16, 4
      %p246 = pnand %p244, %p245
      %p247 = pneg %p246
      // Predicated region
      $region9: #{tpu_custom_call.1} parent=5 // pred_check
        _
      $region10: #{tpu_custom_call.1} parent=5 // pred_check_branch
        %249 = sbr.rel (%p246) target = $region12
      $region11: #{tpu_custom_call.1} parent=5 // pred_region
        %s250 = ssub.s32 %s16, 1
        // Predicated region
        $region13: #{tpu_custom_call.1} parent=11 // pred_check
          %p251 = pneg %p63
        $region14: #{tpu_custom_call.1} parent=11 // pred_check_branch
          %253 = sbr.rel (%p251) target = $region16
        $region15: #{tpu_custom_call.1} parent=11 // pred_region
          _
        $region16: #{tpu_custom_call.1} parent=11 // pred_fallthru
          _
        // Predicated region
        $region17: #{tpu_custom_call.1} parent=11 // pred_check
          %p254 = pneg %p84
        $region18: #{tpu_custom_call.1} parent=11 // pred_check_branch
          %256 = sbr.rel (%p254) target = $region20
        $region19: #{tpu_custom_call.1} parent=11 // pred_region
          _
        $region20: #{tpu_custom_call.1} parent=11 // pred_fallthru
          _
        // Predicated region
        $region21: #{tpu_custom_call.1} parent=11 // pred_check
          %p257 = pneg %p105
        $region22: #{tpu_custom_call.1} parent=11 // pred_check_branch
          %259 = sbr.rel (%p257) target = $region24
        $region23: #{tpu_custom_call.1} parent=11 // pred_region
          %261 = vsyncadd [#allocation3], 0
          %s262 = sshll.u32 %s3, 4
          %s263 = int_to_ptr.hbm [resolvable:$true] %s262
          %s264 = sshll.u32 [#allocation2], 4
          %s265 = int_to_ptr.vmem [resolvable:$true] %s264
          %270 = dma.hbm_to_vmem [thread:$0]  %s263, 6400, %s265, [#allocation3], 128, 128, 8
        $region24: #{tpu_custom_call.1} parent=11 // pred_fallthru
          _
        // Predicated region
        $region25: #{tpu_custom_call.1} parent=11 // pred_check
          %p271 = pneg %p126
        $region26: #{tpu_custom_call.1} parent=11 // pred_check_branch
          %273 = sbr.rel (%p271) target = $region28
        $region27: #{tpu_custom_call.1} parent=11 // pred_region
          _
        $region28: #{tpu_custom_call.1} parent=11 // pred_fallthru
          _
        // Predicated region
        $region29: #{tpu_custom_call.1} parent=11 // pred_check
          %p274 = pneg %p147
        $region30: #{tpu_custom_call.1} parent=11 // pred_check_branch
          %276 = sbr.rel (%p274) target = $region32
        $region31: #{tpu_custom_call.1} parent=11 // pred_region
          _
        $region32: #{tpu_custom_call.1} parent=11 // pred_fallthru
          _
        // Predicated region
        $region33: #{tpu_custom_call.1} parent=11 // pred_check
          %p277 = pneg %p168
        $region34: #{tpu_custom_call.1} parent=11 // pred_check_branch
          %279 = sbr.rel (%p277) target = $region36
        $region35: #{tpu_custom_call.1} parent=11 // pred_region
          _
        $region36: #{tpu_custom_call.1} parent=11 // pred_fallthru
          _
        // Predicated region
        $region37: #{tpu_custom_call.1} parent=11 // pred_check
          %p280 = pneg %p189
        $region38: #{tpu_custom_call.1} parent=11 // pred_check_branch
          %282 = sbr.rel (%p280) target = $region40
        $region39: #{tpu_custom_call.1} parent=11 // pred_region
          _
        $region40: #{tpu_custom_call.1} parent=11 // pred_fallthru
          _
        // Predicated region
        $region41: #{tpu_custom_call.1} parent=11 // pred_check
          %p283 = pneg %p210
        $region42: #{tpu_custom_call.1} parent=11 // pred_check_branch
          %285 = sbr.rel (%p283) target = $region44
        $region43: #{tpu_custom_call.1} parent=11 // pred_region
          _
        $region44: #{tpu_custom_call.1} parent=11 // pred_fallthru
          _
      $region12: #{tpu_custom_call.1} parent=5 // pred_fallthru
        _
      %p286 = scmp.lt.s32.totalorder %s16, 3
      // Predicated region
      $region45: #{tpu_custom_call.1} parent=5 // pred_check
        %p287 = pneg %p286
      $region46: #{tpu_custom_call.1} parent=5 // pred_check_branch
        %289 = sbr.rel (%p287) target = $region48
      $region47: #{tpu_custom_call.1} parent=5 // pred_region
        // Predicated region
        $region49: #{tpu_custom_call.1} parent=47 // pred_check
          %p290 = pneg %p36
        $region50: #{tpu_custom_call.1} parent=47 // pred_check_branch
          %292 = sbr.rel (%p290) target = $region52
        $region51: #{tpu_custom_call.1} parent=47 // pred_region
          %p293 = scmp.lt.s32.totalorder %s16, 2
          %s294 = scalar_select %p293, %s16, 2
          %s295 = smul.addr %s294, 8
          %s296 = scalar_lea.vmem %s0, %s295
        $region52: #{tpu_custom_call.1} parent=47 // pred_fallthru
          _
      $region48: #{tpu_custom_call.1} parent=5 // pred_fallthru
        _
      %p297 = scmp.le.s32.totalorder 1, %s16
      %p298 = scmp.lt.s32.totalorder %s16, 4
      %p299 = pnand %p297, %p298
      %p300 = pneg %p299
      // Predicated region
      $region53: #{tpu_custom_call.1} parent=5 // pred_check
        _
      $region54: #{tpu_custom_call.1} parent=5 // pred_check_branch
        %302 = sbr.rel (%p299) target = $region56
      $region55: #{tpu_custom_call.1} parent=5 // pred_region
        %s303 = ssub.s32 %s16, 1
        // Predicated region
        $region57: #{tpu_custom_call.1} parent=55 // pred_check
          %p304 = pneg %p105
        $region58: #{tpu_custom_call.1} parent=55 // pred_check_branch
          %306 = sbr.rel (%p304) target = $region60
        $region59: #{tpu_custom_call.1} parent=55 // pred_region
          %308 = dma.done [#allocation3], 6400
        $region60: #{tpu_custom_call.1} parent=55 // pred_fallthru
          _
        %p309 = scmp.lt.s32.totalorder %s21, 2
        %s310 = scalar_select %p309, %s21, 2
        %s311 = smul.addr %s310, 8
        %s312 = scalar_lea.vmem %s0, %s311
        %p313 = pneg %p42
        %p314 = pneg %p39
        %p315 = pneg %p63
        %p316 = pneg %p60
        %p317 = pneg %p84
        %p318 = pneg %p81
        %p319 = pneg %p105
        %p320 = pneg %p102
        %p321 = pneg %p126
        %p322 = pneg %p123
        %p323 = pneg %p147
        %p324 = pneg %p144
        %p325 = pneg %p168
        %p326 = pneg %p165
        %p327 = pneg %p189
        %p328 = pneg %p186
        %p329 = pneg %p210
        %p330 = pneg %p207
        %p331 = pneg %p236
        %p332 = pneg %p233
        %p333 = scmp.lt.s32.totalorder %s21, 2
        %s334 = scalar_select %p333, %s21, 2
        %s335 = smul.addr %s334, 8
        %s336 = scalar_lea.vmem %s9, %s335
        %p337 = scmp.lt.s32.totalorder %s21, 2
        %s338 = scalar_select %p337, %s21, 2
        %s339 = smul.addr %s338, 8
        %s340 = scalar_lea.vmem %s0, %s339
        %p341 = scmp.lt.s32.totalorder %s21, 2
        %s342 = scalar_select %p341, %s21, 2
        %s343 = smul.addr %s342, 8
        %s344 = scalar_lea.vmem %s9, %s343
        %v346 = vld [vmem:[%s340] sm:$0xff]
        %v347 = vpack.c.bf16 %v346, %v346
        %v348 = vld [vmem:[%s1] sm:$0xff]
        %v349 = vld [vmem:[%s1 + $0x8] sm:$0xff]
        %v350 = vld [vmem:[%s1 + $0x10] sm:$0xff]
        %v351 = vld [vmem:[%s1 + $0x18] sm:$0xff]
        %v352 = vld [vmem:[%s1 + $0x20] sm:$0xff]
        %v353 = vld [vmem:[%s1 + $0x28] sm:$0xff]
        %v354 = vld [vmem:[%s1 + $0x30] sm:$0xff]
        %v355 = vld [vmem:[%s1 + $0x38] sm:$0xff]
        %v356 = vld [vmem:[%s2] sm:$0xf]
        %v358 = vperm.slane %v356, 0
        %v359 = vperm.slane %v356, 1
        %v360 = vperm.slane %v356, 2
        %v361 = vperm.slane %v356, 3
        %v374 = vunpack.c.l.b16 %v348
        %v375 = vunpack.c.h.b16 %v348
        %v376 = vunpack.c.l.b16 %v349
        %v377 = vunpack.c.h.b16 %v349
        %v378 = vunpack.c.l.b16 %v350
        %v379 = vunpack.c.h.b16 %v350
        %v380 = vunpack.c.l.b16 %v351
        %v381 = vunpack.c.h.b16 %v351
        %v382 = vunpack.c.l.b16 %v352
        %v383 = vunpack.c.h.b16 %v352
        %v384 = vunpack.c.l.b16 %v353
        %v385 = vunpack.c.h.b16 %v353
        %v386 = vunpack.c.l.b16 %v354
        %v387 = vunpack.c.h.b16 %v354
        %v388 = vunpack.c.l.b16 %v355
        %v389 = vunpack.c.h.b16 %v355
        %v390 = vpack.c.b16 %v378, %v374
        %v391 = vpack.c.b16 %v379, %v375
        %v392 = vpack.c.b16 %v380, %v376
        %v393 = vpack.c.b16 %v381, %v377
        %v394 = vpack.c.b16 %v386, %v382
        %v395 = vpack.c.b16 %v387, %v383
        %v396 = vpack.c.b16 %v388, %v384
        %v397 = vpack.c.b16 %v389, %v385
        %vm406 = vcmask 261120
        %v408 = vsel %vm406, %v347, 0
        %410 = vmatpush.bf16.msra.mxu0 0
        %411 = vmatpush.bf16.msra.mxu0 0
        %412 = vmatpush.bf16.msra.mxu0 0
        %413 = vmatpush.bf16.msra.mxu0 0
        %414 = vmatpush.bf16.msra.mxu0 0
        %415 = vmatpush.bf16.msra.mxu0 0
        %416 = vmatpush.bf16.msra.mxu0 %v394
        %417 = vmatpush.bf16.msra.mxu0 %v390
        %418 = vmatmul.bf16.gmra.mxu0 %v408
        %v419 = vpop.f32.mrf.mxu0
        %v420 = vadd.f32 %v358, %v419
        %v421 = vpop.f32.mrf.mxu0
        %422 = vdwg.mxu0
        %423 = vmatpush.bf16.msra.mxu0 0
        %424 = vmatpush.bf16.msra.mxu0 0
        %425 = vmatpush.bf16.msra.mxu0 0
        %426 = vmatpush.bf16.msra.mxu0 0
        %427 = vmatpush.bf16.msra.mxu0 0
        %428 = vmatpush.bf16.msra.mxu0 0
        %429 = vmatpush.bf16.msra.mxu0 %v395
        %430 = vmatpush.bf16.msra.mxu0 %v391
        %431 = vmatmul.bf16.gmra.mxu0 %v408
        %v432 = vpop.f32.mrf.mxu0
        %v433 = vadd.f32 %v359, %v432
        %v434 = vpop.f32.mrf.mxu0
        %435 = vdwg.mxu0
        %436 = vmatpush.bf16.msra.mxu0 0
        %437 = vmatpush.bf16.msra.mxu0 0
        %438 = vmatpush.bf16.msra.mxu0 0
        %439 = vmatpush.bf16.msra.mxu0 0
        %440 = vmatpush.bf16.msra.mxu0 0
        %441 = vmatpush.bf16.msra.mxu0 0
        %442 = vmatpush.bf16.msra.mxu0 %v396
        %443 = vmatpush.bf16.msra.mxu0 %v392
        %444 = vmatmul.bf16.gmra.mxu0 %v408
        %v445 = vpop.f32.mrf.mxu0
        %v446 = vadd.f32 %v360, %v445
        %v447 = vpop.f32.mrf.mxu0
        %448 = vdwg.mxu0
        %449 = vmatpush.bf16.msra.mxu0 0
        %450 = vmatpush.bf16.msra.mxu0 0
        %451 = vmatpush.bf16.msra.mxu0 0
        %452 = vmatpush.bf16.msra.mxu0 0
        %453 = vmatpush.bf16.msra.mxu0 0
        %454 = vmatpush.bf16.msra.mxu0 0
        %455 = vmatpush.bf16.msra.mxu0 %v397
        %456 = vmatpush.bf16.msra.mxu0 %v393
        %457 = vmatmul.bf16.gmra.mxu0 %v408
        %v458 = vpop.f32.mrf.mxu0
        %v459 = vadd.f32 %v361, %v458
        %v460 = vpop.f32.mrf.mxu0
        %461 = vdwg.mxu0
        %v462 = vmax.f32 %v420, 0.0
        %v463 = vmax.f32 %v433, 0.0
        %v464 = vmax.f32 %v446, 0.0
        %v465 = vmax.f32 %v459, 0.0
        %v466 = vpack.c.bf16 %v462, %v462
        %v467 = vpack.c.bf16 %v463, %v463
        %v468 = vpack.c.bf16 %v464, %v464
        %v469 = vpack.c.bf16 %v465, %v465
        %v470 = vld [vmem:[#allocation2] sm:$0xff]
        %v471 = vld [vmem:[#allocation2 + $0x8] sm:$0xff]
        %v472 = vld [vmem:[#allocation2 + $0x10] sm:$0xff]
        %v473 = vld [vmem:[#allocation2 + $0x18] sm:$0xff]
        %v474 = vld [vmem:[#allocation2 + $0x20] sm:$0xff]
        %v475 = vld [vmem:[#allocation2 + $0x28] sm:$0xff]
        %v476 = vld [vmem:[#allocation2 + $0x30] sm:$0xff]
        %v477 = vld [vmem:[#allocation2 + $0x38] sm:$0xff]
        %v478 = vld [vmem:[#allocation2 + $0x40] sm:$0xff]
        %v479 = vld [vmem:[#allocation2 + $0x48] sm:$0xff]
        %v480 = vld [vmem:[#allocation2 + $0x50] sm:$0xff]
        %v481 = vld [vmem:[#allocation2 + $0x58] sm:$0xff]
        %v482 = vld [vmem:[#allocation2 + $0x60] sm:$0xff]
        %v483 = vld [vmem:[#allocation2 + $0x68] sm:$0xff]
        %v484 = vld [vmem:[#allocation2 + $0x70] sm:$0xff]
        %v485 = vld [vmem:[#allocation2 + $0x78] sm:$0xff]
        %v486 = vld [vmem:[#allocation2 + $0x80] sm:$0xff]
        %v487 = vld [vmem:[#allocation2 + $0x88] sm:$0xff]
        %v488 = vld [vmem:[#allocation2 + $0x90] sm:$0xff]
        %v489 = vld [vmem:[#allocation2 + $0x98] sm:$0xff]
        %v490 = vld [vmem:[#allocation2 + $0xa0] sm:$0xff]
        %v491 = vld [vmem:[#allocation2 + $0xa8] sm:$0xff]
        %v492 = vld [vmem:[#allocation2 + $0xb0] sm:$0xff]
        %v493 = vld [vmem:[#allocation2 + $0xb8] sm:$0xff]
        %v494 = vld [vmem:[#allocation2 + $0xc0] sm:$0xff]
        %v495 = vld [vmem:[#allocation2 + $0xc8] sm:$0xff]
        %v496 = vld [vmem:[#allocation2 + $0xd0] sm:$0xff]
        %v497 = vld [vmem:[#allocation2 + $0xd8] sm:$0xff]
        %v498 = vld [vmem:[#allocation2 + $0xe0] sm:$0xff]
        %v499 = vld [vmem:[#allocation2 + $0xe8] sm:$0xff]
        %v500 = vld [vmem:[#allocation2 + $0xf0] sm:$0xff]
        %v501 = vld [vmem:[#allocation2 + $0xf8] sm:$0xff]
        %v502 = vld [vmem:[#allocation2 + $0x100] sm:$0xff]
        %v503 = vld [vmem:[#allocation2 + $0x108] sm:$0xff]
        %v504 = vld [vmem:[#allocation2 + $0x110] sm:$0xff]
        %v505 = vld [vmem:[#allocation2 + $0x118] sm:$0xff]
        %v506 = vld [vmem:[#allocation2 + $0x120] sm:$0xff]
        %v507 = vld [vmem:[#allocation2 + $0x128] sm:$0xff]
        %v508 = vld [vmem:[#allocation2 + $0x130] sm:$0xff]
        %v509 = vld [vmem:[#allocation2 + $0x138] sm:$0xff]
        %v510 = vld [vmem:[#allocation2 + $0x140] sm:$0xff]
        %v511 = vld [vmem:[#allocation2 + $0x148] sm:$0xff]
        %v512 = vld [vmem:[#allocation2 + $0x150] sm:$0xff]
        %v513 = vld [vmem:[#allocation2 + $0x158] sm:$0xff]
        %v514 = vld [vmem:[#allocation2 + $0x160] sm:$0xff]
        %v515 = vld [vmem:[#allocation2 + $0x168] sm:$0xff]
        %v516 = vld [vmem:[#allocation2 + $0x170] sm:$0xff]
        %v517 = vld [vmem:[#allocation2 + $0x178] sm:$0xff]
        %v518 = vld [vmem:[#allocation2 + $0x180] sm:$0xff]
        %v519 = vld [vmem:[#allocation2 + $0x188] sm:$0xff]
        %v520 = vld [vmem:[%s4] sm:$0x3]
        %v522 = vperm.slane %v520, 0
        %v523 = vperm.slane %v520, 1
        %v576 = vunpack.c.l.b16 %v470
        %v577 = vunpack.c.h.b16 %v470
        %v578 = vunpack.c.l.b16 %v471
        %v579 = vunpack.c.h.b16 %v471
        %v580 = vunpack.c.l.b16 %v472
        %v581 = vunpack.c.h.b16 %v472
        %v582 = vunpack.c.l.b16 %v473
        %v583 = vunpack.c.h.b16 %v473
        %v584 = vunpack.c.l.b16 %v474
        %v585 = vunpack.c.h.b16 %v474
        %v586 = vunpack.c.l.b16 %v475
        %v587 = vunpack.c.h.b16 %v475
        %v588 = vunpack.c.l.b16 %v476
        %v589 = vunpack.c.h.b16 %v476
        %v590 = vunpack.c.l.b16 %v477
        %v591 = vunpack.c.h.b16 %v477
        %v592 = vunpack.c.l.b16 %v478
        %v593 = vunpack.c.h.b16 %v478
        %v594 = vunpack.c.l.b16 %v479
        %v595 = vunpack.c.h.b16 %v479
        %v596 = vunpack.c.l.b16 %v480
        %v597 = vunpack.c.h.b16 %v480
        %v598 = vunpack.c.l.b16 %v481
        %v599 = vunpack.c.h.b16 %v481
        %v600 = vunpack.c.l.b16 %v482
        %v601 = vunpack.c.h.b16 %v482
        %v602 = vunpack.c.l.b16 %v483
        %v603 = vunpack.c.h.b16 %v483
        %v604 = vunpack.c.l.b16 %v484
        %v605 = vunpack.c.h.b16 %v484
        %v606 = vunpack.c.l.b16 %v485
        %v607 = vunpack.c.h.b16 %v485
        %v608 = vunpack.c.l.b16 %v486
        %v609 = vunpack.c.h.b16 %v486
        %v610 = vunpack.c.l.b16 %v487
        %v611 = vunpack.c.h.b16 %v487
        %v612 = vunpack.c.l.b16 %v488
        %v613 = vunpack.c.h.b16 %v488
        %v614 = vunpack.c.l.b16 %v489
        %v615 = vunpack.c.h.b16 %v489
        %v616 = vunpack.c.l.b16 %v490
        %v617 = vunpack.c.h.b16 %v490
        %v618 = vunpack.c.l.b16 %v491
        %v619 = vunpack.c.h.b16 %v491
        %v620 = vunpack.c.l.b16 %v492
        %v621 = vunpack.c.h.b16 %v492
        %v622 = vunpack.c.l.b16 %v493
        %v623 = vunpack.c.h.b16 %v493
        %v624 = vunpack.c.l.b16 %v494
        %v625 = vunpack.c.h.b16 %v494
        %v626 = vunpack.c.l.b16 %v495
        %v627 = vunpack.c.h.b16 %v495
        %v628 = vunpack.c.l.b16 %v496
        %v629 = vunpack.c.h.b16 %v496
        %v630 = vunpack.c.l.b16 %v497
        %v631 = vunpack.c.h.b16 %v497
        %v632 = vunpack.c.l.b16 %v498
        %v633 = vunpack.c.h.b16 %v498
        %v634 = vunpack.c.l.b16 %v499
        %v635 = vunpack.c.h.b16 %v499
        %v636 = vunpack.c.l.b16 %v500
        %v637 = vunpack.c.h.b16 %v500
        %v638 = vunpack.c.l.b16 %v501
        %v639 = vunpack.c.h.b16 %v501
        %v640 = vunpack.c.l.b16 %v502
        %v641 = vunpack.c.h.b16 %v502
        %v642 = vunpack.c.l.b16 %v503
        %v643 = vunpack.c.h.b16 %v503
        %v644 = vunpack.c.l.b16 %v504
        %v645 = vunpack.c.h.b16 %v504
        %v646 = vunpack.c.l.b16 %v505
        %v647 = vunpack.c.h.b16 %v505
        %v648 = vunpack.c.l.b16 %v506
        %v649 = vunpack.c.h.b16 %v506
        %v650 = vunpack.c.l.b16 %v507
        %v651 = vunpack.c.h.b16 %v507
        %v652 = vunpack.c.l.b16 %v508
        %v653 = vunpack.c.h.b16 %v508
        %v654 = vunpack.c.l.b16 %v509
        %v655 = vunpack.c.h.b16 %v509
        %v656 = vunpack.c.l.b16 %v510
        %v657 = vunpack.c.h.b16 %v510
        %v658 = vunpack.c.l.b16 %v511
        %v659 = vunpack.c.h.b16 %v511
        %v660 = vunpack.c.l.b16 %v512
        %v661 = vunpack.c.h.b16 %v512
        %v662 = vunpack.c.l.b16 %v513
        %v663 = vunpack.c.h.b16 %v513
        %v664 = vunpack.c.l.b16 %v514
        %v665 = vunpack.c.h.b16 %v514
        %v666 = vunpack.c.l.b16 %v515
        %v667 = vunpack.c.h.b16 %v515
        %v668 = vunpack.c.l.b16 %v516
        %v669 = vunpack.c.h.b16 %v516
        %v670 = vunpack.c.l.b16 %v517
        %v671 = vunpack.c.h.b16 %v517
        %v672 = vunpack.c.l.b16 %v518
        %v673 = vunpack.c.h.b16 %v518
        %v674 = vunpack.c.l.b16 %v519
        %v675 = vunpack.c.h.b16 %v519
        %v676 = vpack.c.b16 %v578, %v576
        %v677 = vpack.c.b16 %v579, %v577
        %v678 = vpack.c.b16 %v582, %v580
        %v679 = vpack.c.b16 %v583, %v581
        %v680 = vpack.c.b16 %v586, %v584
        %v681 = vpack.c.b16 %v587, %v585
        %v682 = vpack.c.b16 %v590, %v588
        %v683 = vpack.c.b16 %v591, %v589
        %v684 = vpack.c.b16 %v594, %v592
        %v685 = vpack.c.b16 %v595, %v593
        %v686 = vpack.c.b16 %v598, %v596
        %v687 = vpack.c.b16 %v599, %v597
        %v688 = vpack.c.b16 %v602, %v600
        %v689 = vpack.c.b16 %v603, %v601
        %v690 = vpack.c.b16 %v606, %v604
        %v691 = vpack.c.b16 %v607, %v605
        %v692 = vpack.c.b16 %v610, %v608
        %v693 = vpack.c.b16 %v611, %v609
        %v694 = vpack.c.b16 %v614, %v612
        %v695 = vpack.c.b16 %v615, %v613
        %v696 = vpack.c.b16 %v618, %v616
        %v697 = vpack.c.b16 %v619, %v617
        %v698 = vpack.c.b16 %v622, %v620
        %v699 = vpack.c.b16 %v623, %v621
        %v700 = vpack.c.b16 %v626, %v624
        %v701 = vpack.c.b16 %v627, %v625
        %v702 = vpack.c.b16 %v630, %v628
        %v703 = vpack.c.b16 %v631, %v629
        %v704 = vpack.c.b16 %v634, %v632
        %v705 = vpack.c.b16 %v635, %v633
        %v706 = vpack.c.b16 %v638, %v636
        %v707 = vpack.c.b16 %v639, %v637
        %v708 = vpack.c.b16 %v642, %v640
        %v709 = vpack.c.b16 %v643, %v641
        %v710 = vpack.c.b16 %v646, %v644
        %v711 = vpack.c.b16 %v647, %v645
        %v712 = vpack.c.b16 %v650, %v648
        %v713 = vpack.c.b16 %v651, %v649
        %v714 = vpack.c.b16 %v654, %v652
        %v715 = vpack.c.b16 %v655, %v653
        %v716 = vpack.c.b16 %v658, %v656
        %v717 = vpack.c.b16 %v659, %v657
        %v718 = vpack.c.b16 %v662, %v660
        %v719 = vpack.c.b16 %v663, %v661
        %v720 = vpack.c.b16 %v666, %v664
        %v721 = vpack.c.b16 %v667, %v665
        %v722 = vpack.c.b16 %v670, %v668
        %v723 = vpack.c.b16 %v671, %v669
        %v724 = vpack.c.b16 %v674, %v672
        %v725 = vpack.c.b16 %v675, %v673
        %vm776 = vcmask 130048
        %v778 = vsel %vm776, %v469, 0
        %780 = vmatpush.bf16.msra.mxu0 %v690
        %781 = vmatpush.bf16.msra.mxu0 %v688
        %782 = vmatpush.bf16.msra.mxu0 %v686
        %783 = vmatpush.bf16.msra.mxu0 %v684
        %784 = vmatpush.bf16.msra.mxu0 %v682
        %785 = vmatpush.bf16.msra.mxu0 %v680
        %786 = vmatpush.bf16.msra.mxu0 %v678
        %787 = vmatpush.bf16.msra.mxu0 %v676
        %788 = vmatmul.bf16.gmra.mxu0 %v466
        %v789 = vpop.f32.mrf.mxu0
        %v790 = vadd.f32 %v522, %v789
        %v791 = vpop.f32.mrf.mxu0
        %792 = vdwg.mxu0
        %793 = vmatpush.bf16.msra.mxu0 %v706
        %794 = vmatpush.bf16.msra.mxu0 %v704
        %795 = vmatpush.bf16.msra.mxu0 %v702
        %796 = vmatpush.bf16.msra.mxu0 %v700
        %797 = vmatpush.bf16.msra.mxu0 %v698
        %798 = vmatpush.bf16.msra.mxu0 %v696
        %799 = vmatpush.bf16.msra.mxu0 %v694
        %800 = vmatpush.bf16.msra.mxu0 %v692
        %801 = vmatmul.bf16.gmra.mxu0 %v467
        %v802 = vpop.f32.mrf.mxu0
        %v803 = vadd.f32 %v790, %v802
        %v804 = vpop.f32.mrf.mxu0
        %805 = vdwg.mxu0
        %806 = vmatpush.bf16.msra.mxu0 %v722
        %807 = vmatpush.bf16.msra.mxu0 %v720
        %808 = vmatpush.bf16.msra.mxu0 %v718
        %809 = vmatpush.bf16.msra.mxu0 %v716
        %810 = vmatpush.bf16.msra.mxu0 %v714
        %811 = vmatpush.bf16.msra.mxu0 %v712
        %812 = vmatpush.bf16.msra.mxu0 %v710
        %813 = vmatpush.bf16.msra.mxu0 %v708
        %814 = vmatmul.bf16.gmra.mxu0 %v468
        %v815 = vpop.f32.mrf.mxu0
        %v816 = vadd.f32 %v803, %v815
        %v817 = vpop.f32.mrf.mxu0
        %818 = vdwg.mxu0
        %819 = vmatpush.bf16.msra.mxu0 0
        %820 = vmatpush.bf16.msra.mxu0 0
        %821 = vmatpush.bf16.msra.mxu0 0
        %822 = vmatpush.bf16.msra.mxu0 0
        %823 = vmatpush.bf16.msra.mxu0 0
        %824 = vmatpush.bf16.msra.mxu0 0
        %825 = vmatpush.bf16.msra.mxu0 0
        %826 = vmatpush.bf16.msra.mxu0 %v724
        %827 = vmatmul.bf16.gmra.mxu0 %v778
        %v828 = vpop.f32.mrf.mxu0
        %v829 = vadd.f32 %v816, %v828
        %v830 = vpop.f32.mrf.mxu0
        %831 = vdwg.mxu0
        %832 = vmatpush.bf16.msra.mxu0 %v691
        %833 = vmatpush.bf16.msra.mxu0 %v689
        %834 = vmatpush.bf16.msra.mxu0 %v687
        %835 = vmatpush.bf16.msra.mxu0 %v685
        %836 = vmatpush.bf16.msra.mxu0 %v683
        %837 = vmatpush.bf16.msra.mxu0 %v681
        %838 = vmatpush.bf16.msra.mxu0 %v679
        %839 = vmatpush.bf16.msra.mxu0 %v677
        %840 = vmatmul.bf16.gmra.mxu0 %v466
        %v841 = vpop.f32.mrf.mxu0
        %v842 = vadd.f32 %v523, %v841
        %v843 = vpop.f32.mrf.mxu0
        %844 = vdwg.mxu0
        %845 = vmatpush.bf16.msra.mxu0 %v707
        %846 = vmatpush.bf16.msra.mxu0 %v705
        %847 = vmatpush.bf16.msra.mxu0 %v703
        %848 = vmatpush.bf16.msra.mxu0 %v701
        %849 = vmatpush.bf16.msra.mxu0 %v699
        %850 = vmatpush.bf16.msra.mxu0 %v697
        %851 = vmatpush.bf16.msra.mxu0 %v695
        %852 = vmatpush.bf16.msra.mxu0 %v693
        %853 = vmatmul.bf16.gmra.mxu0 %v467
        %v854 = vpop.f32.mrf.mxu0
        %v855 = vadd.f32 %v842, %v854
        %v856 = vpop.f32.mrf.mxu0
        %857 = vdwg.mxu0
        %858 = vmatpush.bf16.msra.mxu0 %v723
        %859 = vmatpush.bf16.msra.mxu0 %v721
        %860 = vmatpush.bf16.msra.mxu0 %v719
        %861 = vmatpush.bf16.msra.mxu0 %v717
        %862 = vmatpush.bf16.msra.mxu0 %v715
        %863 = vmatpush.bf16.msra.mxu0 %v713
        %864 = vmatpush.bf16.msra.mxu0 %v711
        %865 = vmatpush.bf16.msra.mxu0 %v709
        %866 = vmatmul.bf16.gmra.mxu0 %v468
        %v867 = vpop.f32.mrf.mxu0
        %v868 = vadd.f32 %v855, %v867
        %v869 = vpop.f32.mrf.mxu0
        %870 = vdwg.mxu0
        %871 = vmatpush.bf16.msra.mxu0 0
        %872 = vmatpush.bf16.msra.mxu0 0
        %873 = vmatpush.bf16.msra.mxu0 0
        %874 = vmatpush.bf16.msra.mxu0 0
        %875 = vmatpush.bf16.msra.mxu0 0
        %876 = vmatpush.bf16.msra.mxu0 0
        %877 = vmatpush.bf16.msra.mxu0 0
        %878 = vmatpush.bf16.msra.mxu0 %v725
        %879 = vmatmul.bf16.gmra.mxu0 %v778
        %v880 = vpop.f32.mrf.mxu0
        %v881 = vadd.f32 %v868, %v880
        %v882 = vpop.f32.mrf.mxu0
        %883 = vdwg.mxu0
        %v884 = vmax.f32 %v829, 0.0
        %v885 = vmax.f32 %v881, 0.0
        %v886 = vpack.c.bf16 %v884, %v884
        %v887 = vpack.c.bf16 %v885, %v885
        %v888 = vld [vmem:[%s5] sm:$0xf]
        %v889 = vld [vmem:[%s5 + $0x4] sm:$0xf]
        %v890 = vld [vmem:[%s5 + $0x8] sm:$0xf]
        %v891 = vld [vmem:[%s5 + $0xc] sm:$0xf]
        %v892 = vld [vmem:[%s5 + $0x10] sm:$0xf]
        %v893 = vld [vmem:[%s5 + $0x14] sm:$0xf]
        %v894 = vld [vmem:[%s5 + $0x18] sm:$0xf]
        %v895 = vld [vmem:[%s5 + $0x1c] sm:$0xf]
        %v896 = vld [vmem:[%s5 + $0x20] sm:$0xf]
        %v897 = vld [vmem:[%s5 + $0x24] sm:$0xf]
        %v898 = vld [vmem:[%s5 + $0x28] sm:$0xf]
        %v899 = vld [vmem:[%s5 + $0x2c] sm:$0xf]
        %v900 = vld [vmem:[%s5 + $0x30] sm:$0xf]
        %v901 = vld [vmem:[%s5 + $0x34] sm:$0xf]
        %v902 = vld [vmem:[%s5 + $0x38] sm:$0xf]
        %v903 = vld [vmem:[%s5 + $0x3c] sm:$0xf]
        %v904 = vld [vmem:[%s5 + $0x40] sm:$0xf]
        %v905 = vld [vmem:[%s5 + $0x44] sm:$0xf]
        %v906 = vld [vmem:[%s5 + $0x48] sm:$0xf]
        %v907 = vld [vmem:[%s5 + $0x4c] sm:$0xf]
        %v908 = vld [vmem:[%s5 + $0x50] sm:$0xf]
        %v909 = vld [vmem:[%s5 + $0x54] sm:$0xf]
        %v910 = vld [vmem:[%s5 + $0x58] sm:$0xf]
        %v911 = vld [vmem:[%s5 + $0x5c] sm:$0xf]
        %v912 = vld [vmem:[%s5 + $0x60] sm:$0xf]
        %v913 = vld [vmem:[%s6] sm:$0x1]
        %v915 = vperm.slane %v913, 0
        %v942 = vunpack.c.l.b16 %v888
        %v943 = vunpack.c.l.b16 %v889
        %v944 = vunpack.c.l.b16 %v890
        %v945 = vunpack.c.l.b16 %v891
        %v946 = vunpack.c.l.b16 %v892
        %v947 = vunpack.c.l.b16 %v893
        %v948 = vunpack.c.l.b16 %v894
        %v949 = vunpack.c.l.b16 %v895
        %v950 = vunpack.c.l.b16 %v896
        %v951 = vunpack.c.l.b16 %v897
        %v952 = vunpack.c.l.b16 %v898
        %v953 = vunpack.c.l.b16 %v899
        %v954 = vunpack.c.l.b16 %v900
        %v955 = vunpack.c.l.b16 %v901
        %v956 = vunpack.c.l.b16 %v902
        %v957 = vunpack.c.l.b16 %v903
        %v958 = vunpack.c.l.b16 %v904
        %v959 = vunpack.c.l.b16 %v905
        %v960 = vunpack.c.l.b16 %v906
        %v961 = vunpack.c.l.b16 %v907
        %v962 = vunpack.c.l.b16 %v908
        %v963 = vunpack.c.l.b16 %v909
        %v964 = vunpack.c.l.b16 %v910
        %v965 = vunpack.c.l.b16 %v911
        %v966 = vunpack.c.l.b16 %v912
        %v967 = vpack.c.b16 %v943, %v942
        %v968 = vpack.c.b16 %v945, %v944
        %v969 = vpack.c.b16 %v947, %v946
        %v970 = vpack.c.b16 %v949, %v948
        %v971 = vpack.c.b16 %v951, %v950
        %v972 = vpack.c.b16 %v953, %v952
        %v973 = vpack.c.b16 %v955, %v954
        %v974 = vpack.c.b16 %v957, %v956
        %v975 = vpack.c.b16 %v959, %v958
        %v976 = vpack.c.b16 %v961, %v960
        %v977 = vpack.c.b16 %v963, %v962
        %v978 = vpack.c.b16 %v965, %v964
        %v979 = vpack.c.b16 %v966, %v966
        %vm992 = vcmask 588800
        %v994 = vsel %vm992, %v887, 0
        %vm996 = vcmask 1043456
        %v998 = vsel %vm996, %v979, 0
        %1000 = vmatpush.bf16.msra.mxu0 %v974
        %1001 = vmatpush.bf16.msra.mxu0 %v973
        %1002 = vmatpush.bf16.msra.mxu0 %v972
        %1003 = vmatpush.bf16.msra.mxu0 %v971
        %1004 = vmatpush.bf16.msra.mxu0 %v970
        %1005 = vmatpush.bf16.msra.mxu0 %v969
        %1006 = vmatpush.bf16.msra.mxu0 %v968
        %1007 = vmatpush.bf16.msra.mxu0 %v967
        %1008 = vmatmul.bf16.gmra.mxu0 %v886
        %v1009 = vpop.f32.mrf.mxu0
        %v1010 = vadd.f32 %v915, %v1009
        %v1011 = vpop.f32.mrf.mxu0
        %1012 = vdwg.mxu0
        %1013 = vmatpush.bf16.msra.mxu0 0
        %1014 = vmatpush.bf16.msra.mxu0 0
        %1015 = vmatpush.bf16.msra.mxu0 0
        %1016 = vmatpush.bf16.msra.mxu0 %v998
        %1017 = vmatpush.bf16.msra.mxu0 %v978
        %1018 = vmatpush.bf16.msra.mxu0 %v977
        %1019 = vmatpush.bf16.msra.mxu0 %v976
        %1020 = vmatpush.bf16.msra.mxu0 %v975
        %1021 = vmatmul.bf16.gmra.mxu0 %v994
        %v1022 = vpop.f32.mrf.mxu0
        %v1023 = vadd.f32 %v1010, %v1022
        %v1024 = vpop.f32.mrf.mxu0
        %1025 = vdwg.mxu0
        %v1026 = vmax.f32 %v1023, 0.0
        %v1027 = vpack.c.bf16 %v1026, %v1026
        %v1028 = vld [vmem:[%s7] sm:$0xf]
        %v1029 = vld [vmem:[%s7 + $0x4] sm:$0xf]
        %v1030 = vld [vmem:[%s7 + $0x8] sm:$0x3]
        %v1031 = vld [vmem:[%s8] sm:$0x1]
        %v1033 = vperm.slane %v1031, 0
        %v1038 = vunpack.c.l.b16 %v1028
        %v1039 = vunpack.c.l.b16 %v1029
        %v1040 = vunpack.c.l.b16 %v1030
        %v1041 = vpack.c.b16 %v1039, %v1038
        %v1042 = vpack.c.b16 %v1040, %v1040
        %vm1044 = vcmask 162816
        %v1046 = vsel %vm1044, %v1027, 0
        %vm1048 = vcmask 1041408
        %v1050 = vsel %vm1048, %v1042, 0
        %1052 = vmatpush.bf16.msra.mxu0 0
        %1053 = vmatpush.bf16.msra.mxu0 0
        %1054 = vmatpush.bf16.msra.mxu0 0
        %1055 = vmatpush.bf16.msra.mxu0 0
        %1056 = vmatpush.bf16.msra.mxu0 0
        %1057 = vmatpush.bf16.msra.mxu0 0
        %1058 = vmatpush.bf16.msra.mxu0 %v1050
        %1059 = vmatpush.bf16.msra.mxu0 %v1041
        %1060 = vmatmul.bf16.gmra.mxu0 %v1046
        %v1061 = vpop.f32.mrf.mxu0
        %v1062 = vadd.f32 %v1033, %v1061
        %v1063 = vpop.f32.mrf.mxu0
        %1064 = vdwg.mxu0
        %vm1065 = vcmask 23552
        %v1066 = vsel %vm1065, %v1062, -inf
        %1067 = vmax.xlane.f32.xlu0 %v1066
        %v1068 = vpop.xlane.xlu0 %1067
        %v1069 = vsub.f32 %v1062, %v1068
        %v1070 = vmul.f32 %v1069, 1.442695
        %v1071 = vpow.pop %v1070
        %v1072 = vsel %vm1065, %v1071, 0.0
        %1073 = vadd.xlane.f32.xlu0 %v1072
        %v1074 = vpop.xlane.xlu0 %1073
        %v1075 = vrcp.pop %v1074
        %v1076 = vmul.f32 %v1071, %v1075
        %1077 = vst.msk [vmem:[%s344] sm:$0xff] %vm1065, %v1076
        %p1078 = scmp.lt.s32.totalorder %s21, 2
        %s1079 = scalar_select %p1078, %s21, 2
        %s1080 = smul.addr %s1079, 8
        %s1081 = scalar_lea.vmem %s9, %s1080
        // Predicated region
        $region61: #{tpu_custom_call.1} parent=55 // pred_check
          %p1082 = pneg %p233
        $region62: #{tpu_custom_call.1} parent=55 // pred_check_branch
          %1084 = sbr.rel (%p1082) target = $region64
        $region63: #{tpu_custom_call.1} parent=55 // pred_region
          _
        $region64: #{tpu_custom_call.1} parent=55 // pred_fallthru
          _
      $region56: #{tpu_custom_call.1} parent=5 // pred_fallthru
        _
      %p1085 = scmp.le.s32.totalorder 2, %s16
      // Predicated region
      $region65: #{tpu_custom_call.1} parent=5 // pred_check
        %p1086 = pneg %p1085
      $region66: #{tpu_custom_call.1} parent=5 // pred_check_branch
        %1088 = sbr.rel (%p1086) target = $region68
      $region67: #{tpu_custom_call.1} parent=5 // pred_region
        %s1089 = ssub.s32 %s16, 2
        // Predicated region
        $region69: #{tpu_custom_call.1} parent=67 // pred_check
          %p1090 = pneg %p239
        $region70: #{tpu_custom_call.1} parent=67 // pred_check_branch
          %1092 = sbr.rel (%p1090) target = $region72
        $region71: #{tpu_custom_call.1} parent=67 // pred_region
          %p1093 = scmp.lt.s32.totalorder %s22, 2
          %s1094 = scalar_select %p1093, %s22, 2
          %s1095 = smul.addr %s1094, 8
          %s1096 = scalar_lea.vmem %s9, %s1095
        $region72: #{tpu_custom_call.1} parent=67 // pred_fallthru
          _
      $region68: #{tpu_custom_call.1} parent=5 // pred_fallthru
        _
    $region6: #{tpu_custom_call.1} parent=1 // loop_footer
      %s20 = sadd.s32 1, %s16
    $region7: #{tpu_custom_call.1} parent=1 // loop_footer_branch
      %15 = sbr.rel target = $region3
    $region8: #{tpu_custom_call.1} parent=1 // loop_exit
      _
    %1097 = vsyncpa [#allocation3], 1
    %s1098 = scalar_lea.sflag [#allocation3], 1
    %1099 = vsyncpa %s1098, 1

</llo_original>
